<compile_context>
chip_gen: v7x
topology: tpu7x:2x2x1
jax: 0.10.0
libtpu: 0.0.40
codegen_flags: <defaults>
</compile_context>

<pallas_src>
import jax
import jax.numpy as jnp
from jax import lax
from jax.experimental import pallas as pl
from jax.experimental.pallas import tpu as pltpu


def mlp_kernel(x_ref, w1_ref, b1_ref, w2_ref, b2_ref, w3_ref, b3_ref, o_ref):
    x = x_ref[...]                       # (blk, D), compute dtype (bf16 or f32)
    cdt = x.dtype

    # Layer 1: (16, D) . (blk, D)^T -> (16, blk).  Batch moves onto the lanes.
    # TODO(synk): on v7x audit the bundle dump for a vxpose of the x tile here;
    # if it becomes the binding slot, have the producer emit x as (D, B) instead.
    h1 = lax.dot_general(w1_ref[...], x, (((1,), (1,)), ((), ())),
                         preferred_element_type=jnp.float32)
    h1 = jnp.maximum(h1 + b1_ref[...], 0.0)            # b1: (16, 1) f32, lane-broadcast

    # Layer 2: (8, 16) @ (16, blk) -> (8, blk)
    h2 = jnp.dot(w2_ref[...], h1.astype(cdt), preferred_element_type=jnp.float32)
    h2 = jnp.maximum(h2 + b2_ref[...], 0.0)            # b2: (8, 1) f32

    # Layer 3: (1, 8) @ (8, blk) -> (1, blk) + scalar bias read from SMEM.
    y = jnp.dot(w3_ref[...], h2.astype(cdt), preferred_element_type=jnp.float32)
    o_ref[...] = (y + b3_ref[0]).astype(o_ref.dtype)   # lane-dense output row


def _vmem_capacity_bytes():
    try:
        return int(pltpu.get_tpu_info().vmem_capacity_bytes)
    except Exception:
        return 64 << 20          # v7x-safe fallback (smallest VMEM of the three gens)


def _pick_block_b(B, D, compute_dtype):
    """Largest 128-aligned batch tile whose double-buffered x/out tiles plus f32
    intermediates fit comfortably in ~1/3 of this chip's VMEM (cap 32768 rows).
    No artificial megacore split: single-TC chips pay pure per-step overhead for
    it; B larger than the tile still yields many 'parallel' steps for v7x."""
    itemsize = jnp.dtype(compute_dtype).itemsize
    lane_d = ((D + 127) // 128) * 128
    budget = min(_vmem_capacity_bytes() // 3, 48 << 20)
    per_row = (2 * lane_d * itemsize     # double-buffered x tile (lane-padded)
               + 2 * 8 * 4               # double-buffered (1, blk) out tile (sublane-padded)
               + (16 + 8) * 4 * 2)       # f32 intermediates h1/h2 (+slack)
    blk = min(budget // per_row, 32768)
    blk = max((blk // 128) * 128, 128)
    return B if B <= blk else blk


def my_modle_forward(x, params, *, compute_dtype=jnp.bfloat16, block_b=None):
    """x: (B, D). Returns (B,) float32, matching MyModle.forward (incl. squeeze(1)).

    compute_dtype=bfloat16 halves x's HBM traffic (the kernel is memory-bound);
    all matmuls still accumulate in float32.  Pass jnp.float32 for bit-tight
    results.  Ideally the caller already supplies x in compute_dtype — otherwise
    the cast below costs one extra XLA pass over x."""
    B, D = x.shape
    w1, b1, w2, b2, w3, b3 = params

    if block_b is None:
        block_b = _pick_block_b(B, D, compute_dtype)
    if block_b != B:
        assert block_b % 128 == 0, "block_b must be a multiple of 128 (or equal B)"

    xc = x.astype(compute_dtype)
    w1c, w2c, w3c = (w.astype(compute_dtype) for w in (w1, w2, w3))
    b1c = b1.reshape(16, 1).astype(jnp.float32)
    b2c = b2.reshape(8, 1).astype(jnp.float32)
    b3c = b3.reshape(1).astype(jnp.float32)          # true scalar -> SMEM

    grid = (pl.cdiv(B, block_b),)

    # Explicit scoped-VMEM budget from the padded, double-buffered tiles + slack,
    # clamped to this chip's capacity (no hard v7x-style 32 MiB cap on v5e/v6e).
    itemsize = jnp.dtype(compute_dtype).itemsize
    lane_d = ((D + 127) // 128) * 128
    blk_pad = ((block_b + 127) // 128) * 128
    x_tile = blk_pad * lane_d * itemsize
    out_tile = 8 * blk_pad * 4
    inter = blk_pad * (16 + 8 + 8) * 4
    cap = _vmem_capacity_bytes()
    vmem_limit = 2 * (x_tile + out_tile) + 2 * inter + (4 << 20)
    vmem_limit = int(min(max(vmem_limit, 16 << 20), max(cap - (4 << 20), 32 << 20)))

    flops = 2 * B * (D * 16 + 16 * 8 + 8 * 1) + 2 * B * (16 + 8 + 1)
    bytes_accessed = (B * D * itemsize + B * 4
                      + (16 * D + 8 * 16 + 8) * itemsize + (16 + 8 + 1) * 4)

    out = pl.pallas_call(
        mlp_kernel,
        out_shape=jax.ShapeDtypeStruct((1, B), jnp.float32),
        grid_spec=pltpu.PrefetchScalarGridSpec(
            num_scalar_prefetch=0,
            grid=grid,
            in_specs=[
                # TODO(synk): consider pipeline_mode=pl.Buffered(3) on x if a trace
                # shows exposed DMA at the chosen block_b.
                pl.BlockSpec((block_b, D), lambda i: (i, 0)),       # x batch tile
                pl.BlockSpec((16, D), lambda i: (0, 0)),            # W1 (out, in), resident
                pl.BlockSpec((16, 1), lambda i: (0, 0)),            # b1
                pl.BlockSpec((8, 16), lambda i: (0, 0)),            # W2
                pl.BlockSpec((8, 1), lambda i: (0, 0)),             # b2
                pl.BlockSpec((1, 8), lambda i: (0, 0)),             # W3
                pl.BlockSpec(memory_space=pltpu.MemorySpace.SMEM),  # b3 scalar
            ],
            out_specs=pl.BlockSpec((1, block_b), lambda i: (0, i)),  # lane-dense row
        ),
        compiler_params=pltpu.CompilerParams(
            dimension_semantics=("parallel",),
            vmem_limit_bytes=vmem_limit,
        ),
        cost_estimate=pl.CostEstimate(flops=int(flops), transcendentals=0,
                                      bytes_accessed=int(bytes_accessed)),
    )(xc, w1c, b1c, w2c, b2c, w3c, b3c)

    # Partial last tile: Pallas masks the (1, block_b) HBM writeback, so padded
    # x rows only ever feed masked-out output lanes (keep this assumption if the
    # kernel is ever converted to manual pl.ANY DMA).
    return out.reshape(B)    # == squeeze(1)


def init_params(key, input_dim):
    """Deterministic init mirroring nn.Linear defaults; PyTorch (out, in) weight
    layout and (out, 1) bias columns for the transposed kernel."""
    ks = jax.random.split(key, 6)

    def linear(kw, kb, fan_in, fan_out):
        bound = 1.0 / jnp.sqrt(jnp.float32(fan_in))
        w = jax.random.uniform(kw, (fan_out, fan_in), jnp.float32, -bound, bound)
        b = jax.random.uniform(kb, (fan_out, 1), jnp.float32, -bound, bound)
        return w, b

    w1, b1 = linear(ks[0], ks[1], input_dim, 16)
    w2, b2 = linear(ks[2], ks[3], 16, 8)
    w3, b3 = linear(ks[4], ks[5], 8, 1)
    return (w1, b1, w2, b2, w3, b3)


def _reference(x, params):
    w1, b1, w2, b2, w3, b3 = params
    h = jnp.maximum(x @ w1.T + b1.T, 0.0)
    h = jnp.maximum(h @ w2.T + b2.T, 0.0)
    return (h @ w3.T + b3.T).reshape(x.shape[0])


if __name__ == "__main__":
    key = jax.random.PRNGKey(0)
    k_x, k_p, k_x2, k_x3 = jax.random.split(key, 4)

    D = 32
    params = init_params(k_p, D)

    # 1) Exact float32 path, single grid step (blocks == full extents).
    B = 8
    x = jax.random.normal(k_x, (B, D), jnp.float32)
    y = jax.block_until_ready(my_modle_forward(x, params, compute_dtype=jnp.float32))
    ref = _reference(x, params)
    assert y.shape == (B,), y.shape
    assert jnp.allclose(y, ref, atol=1e-5, rtol=1e-5)

    # 2) Default bfloat16 fast path (f32 accumulation), looser tolerance.
    B2 = 512
    x2 = jax.random.normal(k_x2, (B2, D), jnp.float32)
    y2 = jax.block_until_ready(my_modle_forward(x2, params))
    ref2 = _reference(x2, params)
    assert y2.shape == (B2,), y2.shape
    assert jnp.allclose(y2, ref2, atol=2e-2, rtol=2e-2)

    # 3) Tiled path with a partial last tile (640 = 256 + 256 + 128), bf16.
    B3 = 640
    x3 = jax.random.normal(k_x3, (B3, D), jnp.float32)
    y3 = jax.block_until_ready(my_modle_forward(x3, params, block_b=256))
    ref3 = _reference(x3, params)
    assert y3.shape == (B3,), y3.shape
    assert jnp.allclose(y3, ref3, atol=2e-2, rtol=2e-2)

    print("KERNEL_OK")
</pallas_src>

<mosaic_0001>
module attributes {stable_mosaic.version = 11 : i64} {
  func.func @mlp_kernel(%arg0: i32, %arg1: memref<8x32xf32, #tpu.memory_space<vmem>>, %arg2: memref<16x32xf32, #tpu.memory_space<vmem>>, %arg3: memref<16x1xf32, #tpu.memory_space<vmem>>, %arg4: memref<8x16xf32, #tpu.memory_space<vmem>>, %arg5: memref<8x1xf32, #tpu.memory_space<vmem>>, %arg6: memref<1x8xf32, #tpu.memory_space<vmem>>, %arg7: memref<1xf32, #tpu.memory_space<smem>>, %arg8: memref<1x8xf32, #tpu.memory_space<vmem>>) attributes {dimension_semantics = [#tpu.dimension_semantics<parallel>], iteration_bounds = array<i64: 1>, scalar_prefetch = 0 : i64, scratch_operands = 0 : i64, tpu.core_type = #tpu.core_type<tc>, window_params = [{transform_indices = @transform_0, window_bounds = array<i64: 8, 32>}, {pipeline_mode = #tpu.pipeline_mode<synchronous>, transform_indices = @transform_1, window_bounds = array<i64: 16, 32>}, {pipeline_mode = #tpu.pipeline_mode<synchronous>, transform_indices = @transform_2, window_bounds = array<i64: 16, 1>}, {pipeline_mode = #tpu.pipeline_mode<synchronous>, transform_indices = @transform_3, window_bounds = array<i64: 8, 16>}, {pipeline_mode = #tpu.pipeline_mode<synchronous>, transform_indices = @transform_4, window_bounds = array<i64: 8, 1>}, {pipeline_mode = #tpu.pipeline_mode<synchronous>, transform_indices = @transform_5, window_bounds = array<i64: 1, 8>}, {transform_indices = @transform_6, window_bounds = array<i64: 1>}, {transform_indices = @transform_7, window_bounds = array<i64: 1, 8>}]} {
    %c0 = arith.constant 0 : index
    %c0_0 = arith.constant 0 : index
    %0 = vector.load %arg1[%c0, %c0_0] : memref<8x32xf32, #tpu.memory_space<vmem>>, vector<8x32xf32>
    %c0_1 = arith.constant 0 : index
    %c0_2 = arith.constant 0 : index
    %1 = vector.load %arg2[%c0_1, %c0_2] : memref<16x32xf32, #tpu.memory_space<vmem>>, vector<16x32xf32>
    %cst = arith.constant dense<0.000000e+00> : vector<16x8xf32>
    %2 = tpu.matmul %1, %0, %cst {dimension_numbers = #tpu.dot_dimension_numbers<[1], [1], [0], [0], [0, 0, 1, 0], [], []>} : vector<16x32xf32>, vector<8x32xf32>, vector<16x8xf32> -> vector<16x8xf32>
    %c0_3 = arith.constant 0 : index
    %c0_4 = arith.constant 0 : index
    %3 = vector.load %arg3[%c0_3, %c0_4] : memref<16x1xf32, #tpu.memory_space<vmem>>, vector<16x1xf32>
    %4 = vector.broadcast %3 : vector<16x1xf32> to vector<16x8xf32>
    %5 = arith.addf %2, %4 : vector<16x8xf32>
    %cst_5 = arith.constant 0.000000e+00 : f32
    %6 = vector.broadcast %cst_5 : f32 to vector<16x8xf32>
    %7 = arith.maximumf %5, %6 : vector<16x8xf32>
    %c0_6 = arith.constant 0 : index
    %c0_7 = arith.constant 0 : index
    %8 = vector.load %arg4[%c0_6, %c0_7] : memref<8x16xf32, #tpu.memory_space<vmem>>, vector<8x16xf32>
    %cst_8 = arith.constant dense<0.000000e+00> : vector<8x8xf32>
    %9 = tpu.matmul %8, %7, %cst_8 {dimension_numbers = #tpu.dot_dimension_numbers<[1], [0], [0], [1], [0, 0, 1, 1], [], []>} : vector<8x16xf32>, vector<16x8xf32>, vector<8x8xf32> -> vector<8x8xf32>
    %c0_9 = arith.constant 0 : index
    %c0_10 = arith.constant 0 : index
    %10 = vector.load %arg5[%c0_9, %c0_10] : memref<8x1xf32, #tpu.memory_space<vmem>>, vector<8x1xf32>
    %11 = vector.broadcast %10 : vector<8x1xf32> to vector<8x8xf32>
    %12 = arith.addf %9, %11 : vector<8x8xf32>
    %cst_11 = arith.constant 0.000000e+00 : f32
    %13 = vector.broadcast %cst_11 : f32 to vector<8x8xf32>
    %14 = arith.maximumf %12, %13 : vector<8x8xf32>
    %c0_12 = arith.constant 0 : index
    %c0_13 = arith.constant 0 : index
    %15 = vector.load %arg6[%c0_12, %c0_13] : memref<1x8xf32, #tpu.memory_space<vmem>>, vector<1x8xf32>
    %cst_14 = arith.constant dense<0.000000e+00> : vector<1x8xf32>
    %16 = tpu.matmul %15, %14, %cst_14 {dimension_numbers = #tpu.dot_dimension_numbers<[1], [0], [0], [1], [0, 0, 1, 1], [], []>} : vector<1x8xf32>, vector<8x8xf32>, vector<1x8xf32> -> vector<1x8xf32>
    %c0_15 = arith.constant 0 : index
    %17 = memref.load %arg7[%c0_15] : memref<1xf32, #tpu.memory_space<smem>>
    %18 = vector.broadcast %17 : f32 to vector<1x8xf32>
    %19 = arith.addf %16, %18 : vector<1x8xf32>
    %c0_16 = arith.constant 0 : index
    %c0_17 = arith.constant 0 : index
    %20 = vector.load %arg8[%c0_16, %c0_17] : memref<1x8xf32, #tpu.memory_space<vmem>>, vector<1x8xf32>
    tpu.vector_store %arg8[%c0_16, %c0_17], %19 {strides = array<i32>} : memref<1x8xf32, #tpu.memory_space<vmem>>, vector<1x8xf32>,
    return
  }
  func.func @transform_0(%arg0: i32) -> (i32, i32) {
    %c0_i32 = arith.constant 0 : i32
    %c0_i32_0 = arith.constant 0 : i32
    return %arg0, %c0_i32 : i32, i32
  }
  func.func @transform_1(%arg0: i32) -> (i32, i32) {
    %c0_i32 = arith.constant 0 : i32
    %c0_i32_0 = arith.constant 0 : i32
    %c0_i32_1 = arith.constant 0 : i32
    return %c0_i32, %c0_i32_0 : i32, i32
  }
  func.func @transform_2(%arg0: i32) -> (i32, i32) {
    %c0_i32 = arith.constant 0 : i32
    %c0_i32_0 = arith.constant 0 : i32
    %c0_i32_1 = arith.constant 0 : i32
    return %c0_i32, %c0_i32_0 : i32, i32
  }
  func.func @transform_3(%arg0: i32) -> (i32, i32) {
    %c0_i32 = arith.constant 0 : i32
    %c0_i32_0 = arith.constant 0 : i32
    %c0_i32_1 = arith.constant 0 : i32
    return %c0_i32, %c0_i32_0 : i32, i32
  }
  func.func @transform_4(%arg0: i32) -> (i32, i32) {
    %c0_i32 = arith.constant 0 : i32
    %c0_i32_0 = arith.constant 0 : i32
    %c0_i32_1 = arith.constant 0 : i32
    return %c0_i32, %c0_i32_0 : i32, i32
  }
  func.func @transform_5(%arg0: i32) -> (i32, i32) {
    %c0_i32 = arith.constant 0 : i32
    %c0_i32_0 = arith.constant 0 : i32
    %c0_i32_1 = arith.constant 0 : i32
    return %c0_i32, %c0_i32_0 : i32, i32
  }
  func.func @transform_6(%arg0: i32) -> i32 {
    %c0_i32 = arith.constant 0 : i32
    %c0_i32_0 = arith.constant 0 : i32
    return %c0_i32 : i32
  }
  func.func @transform_7(%arg0: i32) -> (i32, i32) {
    %c0_i32 = arith.constant 0 : i32
    %c0_i32_0 = arith.constant 0 : i32
    return %c0_i32, %arg0 : i32, i32
  }
}

</mosaic_0001>

<llo_original>
// kernel: tpu_custom_call.1
$region0: #{tpu_custom_call.1}
  #allocation0 [shape = 'u32[]', space=smem, size = 0x4, offset = 0x4, fixed_abs, tag = 'smem constant byte address 0x4 - core index']
  #allocation1 [shape = 'u32[144,128]{1,0:T(1,128)}', space=vmem, size = 0x12000, scoped, tag = 'internal scratch']
  #allocation2 [shape = 'f32[1]{0:T(128)S(6)}', space=smem, size = 0x200, scoped, tag = 'scoped memory for tpu_custom_call.1']
  %s0 = inlined_call_operand.vmem [shape: f32[8,32], index: 0, kind: input, shape index: {}]
  %s1 = inlined_call_operand.vmem [shape: f32[16,32], index: 1, kind: input, shape index: {}]
  %s2 = inlined_call_operand.vmem [shape: f32[16,1], index: 2, kind: input, shape index: {}]
  %s3 = inlined_call_operand.vmem [shape: f32[8,16], index: 3, kind: input, shape index: {}]
  %s4 = inlined_call_operand.vmem [shape: f32[8,1], index: 4, kind: input, shape index: {}]
  %s5 = inlined_call_operand.vmem [shape: f32[1,8], index: 5, kind: input, shape index: {}]
  %s6 = inlined_call_operand.<no memory space> [shape: f32[1], index: 6, kind: input, shape index: {}]
  %s7 = inlined_call_operand.hbm [shape: f32[1,8], index: 7, kind: output, shape index: {}]
  %s8 = sld [smem:[#allocation0]]
  $region38: #{tpu_custom_call.1} parent=0
    _
  %s10 = ssub.s32 1, %s8
  %s11 = scalar_select 0, %s10, %s8
  %12 = sst [smem:[#allocation2]] %s6
  $region1: #{tpu_custom_call.1} parent=0
    #allocation3 [shape = 'u8[512]{0}', space=vmem, size = 0x400, scoped, tag = 'output window, operand 0, single buffered']
    #allocation4 [shape = 's32[1]{0}', space=sflag, size = 0x4, scoped, tag = 'scoped memory for tpu_custom_call.1']
    %13 = vsyncpa [#allocation4], 0
    // Predicated region
    $region2: #{tpu_custom_call.1} parent=1 // pred_check
      _
    $region3: #{tpu_custom_call.1} parent=1 // pred_check_branch
      %15 = sbr.rel (0) target = $region5
    $region4: #{tpu_custom_call.1} parent=1 // pred_region
      _
    $region5: #{tpu_custom_call.1} parent=1 // pred_fallthru
      _
    // Predicated region
    $region6: #{tpu_custom_call.1} parent=1 // pred_check
      _
    $region7: #{tpu_custom_call.1} parent=1 // pred_check_branch
      %17 = sbr.rel (0) target = $region9
    $region8: #{tpu_custom_call.1} parent=1 // pred_region
      _
    $region9: #{tpu_custom_call.1} parent=1 // pred_fallthru
      _
    // Predicated region
    $region10: #{tpu_custom_call.1} parent=1 // pred_check
      _
    $region11: #{tpu_custom_call.1} parent=1 // pred_check_branch
      %19 = sbr.rel (0) target = $region13
    $region12: #{tpu_custom_call.1} parent=1 // pred_region
      _
    $region13: #{tpu_custom_call.1} parent=1 // pred_fallthru
      _
    // Predicated region
    $region14: #{tpu_custom_call.1} parent=1 // pred_check
      _
    $region15: #{tpu_custom_call.1} parent=1 // pred_check_branch
      %21 = sbr.rel (0) target = $region17
    $region16: #{tpu_custom_call.1} parent=1 // pred_region
      _
    $region17: #{tpu_custom_call.1} parent=1 // pred_fallthru
      _
    // Predicated region
    $region18: #{tpu_custom_call.1} parent=1 // pred_check
      _
    $region19: #{tpu_custom_call.1} parent=1 // pred_check_branch
      %23 = sbr.rel (0) target = $region21
    $region20: #{tpu_custom_call.1} parent=1 // pred_region
      _
    $region21: #{tpu_custom_call.1} parent=1 // pred_fallthru
      _
    // Predicated region
    $region22: #{tpu_custom_call.1} parent=1 // pred_check
      _
    $region23: #{tpu_custom_call.1} parent=1 // pred_check_branch
      %25 = sbr.rel (0) target = $region25
    $region24: #{tpu_custom_call.1} parent=1 // pred_region
      _
    $region25: #{tpu_custom_call.1} parent=1 // pred_fallthru
      _
    // Predicated region
    $region26: #{tpu_custom_call.1} parent=1 // pred_check
      _
    $region27: #{tpu_custom_call.1} parent=1 // pred_check_branch
      %27 = sbr.rel (0) target = $region29
    $region28: #{tpu_custom_call.1} parent=1 // pred_region
      _
    $region29: #{tpu_custom_call.1} parent=1 // pred_fallthru
      _
    %v28 = vld [vmem:[%s0] sm:$0xff]
    %v29 = vld [vmem:[%s1] sm:$0xff]
    %v30 = vld [vmem:[%s1 + $0x8] sm:$0xff]
    %v31 = vld [vmem:[%s2] sm:$0xff]
    %v32 = vld [vmem:[%s2 + $0x8] sm:$0xff]
    %34 = vset.pattern.permute.xlu0 0
    %35 = vperm.xlu0 %34, %v31
    %v36 = vpop.permute.xlu0 %35
    %39 = vset.pattern.permute.xlu0 0
    %40 = vperm.xlu0 %39, %v32
    %v41 = vpop.permute.xlu0 %40
    %vm43 = vcmask 261120
    %v45 = vsel %vm43, %v29, 0
    %v48 = vsel %vm43, %v30, 0
    %v51 = vsel %vm43, %v28, 0
    %53 = vmatprep.subr.mxu0 0.0
    %54 = vmatpush1.xpose.msra.mxu0 %v51
    %55 = vmatprep.subr.mxu0 0.0
    %56 = vmatpush1.xpose.msra.mxu0 0.0
    %57 = vmatprep.subr.mxu0 0.0
    %58 = vmatpush1.xpose.msra.mxu0 0.0
    %59 = vmatprep.subr.mxu0 0.0
    %60 = vmatpush1.xpose.msra.mxu0 0.0
    %61 = vmatprep.subr.mxu0 0.0
    %62 = vmatpush1.xpose.msra.mxu0 0.0
    %63 = vmatprep.subr.mxu0 0.0
    %64 = vmatpush1.xpose.msra.mxu0 0.0
    %65 = vmatprep.subr.mxu0 0.0
    %66 = vmatpush1.xpose.msra.mxu0 0.0
    %67 = vmatprep.subr.mxu0 0.0
    %68 = vmatpush1.xpose.msra.mxu0 0.0
    %69 = vmatprep.subr.mxu0 0.0
    %70 = vmatpush1.xpose.msra.mxu0 0.0
    %71 = vmatprep.subr.mxu0 0.0
    %72 = vmatpush1.xpose.msra.mxu0 0.0
    %73 = vmatprep.subr.mxu0 0.0
    %74 = vmatpush1.xpose.msra.mxu0 0.0
    %75 = vmatprep.subr.mxu0 0.0
    %76 = vmatpush1.xpose.msra.mxu0 0.0
    %77 = vmatprep.subr.mxu0 0.0
    %78 = vmatpush1.xpose.msra.mxu0 0.0
    %79 = vmatprep.subr.mxu0 0.0
    %80 = vmatpush1.xpose.msra.mxu0 0.0
    %81 = vmatprep.subr.mxu0 0.0
    %82 = vmatpush1.xpose.msra.mxu0 0.0
    %83 = vmatprep.subr.mxu0 0.0
    %84 = vmatpush1.xpose.msra.mxu0 0.0
    %85 = vmatprep.subr.mxu0 0.0
    %86 = vmatpush1.xpose.msra.mxu0 0.0
    %87 = vmatprep.subr.mxu0 0.0
    %88 = vmatpush1.xpose.msra.mxu0 0.0
    %89 = vmatprep.subr.mxu0 0.0
    %90 = vmatpush1.xpose.msra.mxu0 0.0
    %91 = vmatprep.subr.mxu0 0.0
    %92 = vmatpush1.xpose.msra.mxu0 0.0
    %93 = vmatprep.subr.mxu0 0.0
    %94 = vmatpush1.xpose.msra.mxu0 0.0
    %95 = vmatprep.subr.mxu0 0.0
    %96 = vmatpush1.xpose.msra.mxu0 0.0
    %97 = vmatprep.subr.mxu0 0.0
    %98 = vmatpush1.xpose.msra.mxu0 0.0
    %99 = vmatprep.subr.mxu0 0.0
    %100 = vmatpush1.xpose.msra.mxu0 0.0
    %101 = vmatprep.subr.mxu0 0.0
    %102 = vmatpush1.xpose.msra.mxu0 0.0
    %103 = vmatprep.subr.mxu0 0.0
    %104 = vmatpush1.xpose.msra.mxu0 0.0
    %105 = vmatprep.subr.mxu0 0.0
    %106 = vmatpush1.xpose.msra.mxu0 0.0
    %107 = vmatprep.subr.mxu0 0.0
    %108 = vmatpush1.xpose.msra.mxu0 0.0
    %109 = vmatprep.subr.mxu0 0.0
    %110 = vmatpush1.xpose.msra.mxu0 0.0
    %111 = vmatprep.subr.mxu0 0.0
    %112 = vmatpush1.xpose.msra.mxu0 0.0
    %113 = vmatprep.subr.mxu0 0.0
    %114 = vmatpush1.xpose.msra.mxu0 0.0
    %115 = vmatprep.subr.mxu0 0.0
    %116 = vmatpush1.xpose.msra.mxu0 0.0
    %117 = vmatprep.mubr.f32.mxu0 0.0
    %118 = vmatmul.mubr.f32.gmra.mrb[0].mxu0 %v45
    %v119 = vpop.f32.mrb[0].mxu0
    %v120 = vadd.f32 %v36, %v119
    %v121 = vpop.f32.mrb[0].mxu0
    %122 = vmatprep.mubr.f32.mxu0 0.0
    %123 = vmatmul.mubr.f32.gmra.mrb[0].mxu0 %v48
    %v124 = vpop.f32.mrb[0].mxu0
    %v125 = vadd.f32 %v41, %v124
    %v126 = vpop.f32.mrb[0].mxu0
    %127 = vdwg.mxu0
    %v128 = vmax.f32 %v120, 0.0
    %v129 = vmax.f32 %v125, 0.0
    %v130 = vld [vmem:[%s3] sm:$0xff]
    %v131 = vld [vmem:[%s4] sm:$0xff]
    %133 = vset.pattern.permute.xlu0 0
    %134 = vperm.xlu0 %133, %v131
    %v135 = vpop.permute.xlu0 %134
    %vm137 = vcmask 130048
    %v139 = vsel %vm137, %v130, 0
    %141 = vmatprep.subr.mxu0 0.0
    %142 = vmatpush1.msra.mxu0 %v128
    %143 = vmatprep.subr.mxu0 0.0
    %144 = vmatpush1.msra.mxu0 %v129
    %145 = vmatprep.subr.mxu0 0.0
    %146 = vmatpush1.msra.mxu0 0.0
    %147 = vmatprep.subr.mxu0 0.0
    %148 = vmatpush1.msra.mxu0 0.0
    %149 = vmatprep.subr.mxu0 0.0
    %150 = vmatpush1.msra.mxu0 0.0
    %151 = vmatprep.subr.mxu0 0.0
    %152 = vmatpush1.msra.mxu0 0.0
    %153 = vmatprep.subr.mxu0 0.0
    %154 = vmatpush1.msra.mxu0 0.0
    %155 = vmatprep.subr.mxu0 0.0
    %156 = vmatpush1.msra.mxu0 0.0
    %157 = vmatprep.subr.mxu0 0.0
    %158 = vmatpush1.msra.mxu0 0.0
    %159 = vmatprep.subr.mxu0 0.0
    %160 = vmatpush1.msra.mxu0 0.0
    %161 = vmatprep.subr.mxu0 0.0
    %162 = vmatpush1.msra.mxu0 0.0
    %163 = vmatprep.subr.mxu0 0.0
    %164 = vmatpush1.msra.mxu0 0.0
    %165 = vmatprep.subr.mxu0 0.0
    %166 = vmatpush1.msra.mxu0 0.0
    %167 = vmatprep.subr.mxu0 0.0
    %168 = vmatpush1.msra.mxu0 0.0
    %169 = vmatprep.subr.mxu0 0.0
    %170 = vmatpush1.msra.mxu0 0.0
    %171 = vmatprep.subr.mxu0 0.0
    %172 = vmatpush1.msra.mxu0 0.0
    %173 = vmatprep.subr.mxu0 0.0
    %174 = vmatpush1.msra.mxu0 0.0
    %175 = vmatprep.subr.mxu0 0.0
    %176 = vmatpush1.msra.mxu0 0.0
    %177 = vmatprep.subr.mxu0 0.0
    %178 = vmatpush1.msra.mxu0 0.0
    %179 = vmatprep.subr.mxu0 0.0
    %180 = vmatpush1.msra.mxu0 0.0
    %181 = vmatprep.subr.mxu0 0.0
    %182 = vmatpush1.msra.mxu0 0.0
    %183 = vmatprep.subr.mxu0 0.0
    %184 = vmatpush1.msra.mxu0 0.0
    %185 = vmatprep.subr.mxu0 0.0
    %186 = vmatpush1.msra.mxu0 0.0
    %187 = vmatprep.subr.mxu0 0.0
    %188 = vmatpush1.msra.mxu0 0.0
    %189 = vmatprep.subr.mxu0 0.0
    %190 = vmatpush1.msra.mxu0 0.0
    %191 = vmatprep.subr.mxu0 0.0
    %192 = vmatpush1.msra.mxu0 0.0
    %193 = vmatprep.subr.mxu0 0.0
    %194 = vmatpush1.msra.mxu0 0.0
    %195 = vmatprep.subr.mxu0 0.0
    %196 = vmatpush1.msra.mxu0 0.0
    %197 = vmatprep.subr.mxu0 0.0
    %198 = vmatpush1.msra.mxu0 0.0
    %199 = vmatprep.subr.mxu0 0.0
    %200 = vmatpush1.msra.mxu0 0.0
    %201 = vmatprep.subr.mxu0 0.0
    %202 = vmatpush1.msra.mxu0 0.0
    %203 = vmatprep.subr.mxu0 0.0
    %204 = vmatpush1.msra.mxu0 0.0
    %205 = vmatprep.mubr.f32.mxu0 0.0
    %206 = vmatmul.mubr.f32.gmra.mrb[0].mxu0 %v139
    %v207 = vpop.f32.mrb[0].mxu0
    %v208 = vadd.f32 %v135, %v207
    %v209 = vpop.f32.mrb[0].mxu0
    %210 = vdwg.mxu0
    %v211 = vmax.f32 %v208, 0.0
    %v212 = vld [vmem:[%s5] sm:$0x1]
    %s213 = sld [smem:[#allocation2]]
    %v214 = vstv %s213
    %vm215 = vcmask 64512
    %v217 = vsel %vm215, %v212, 0
    %219 = vmatprep.subr.mxu0 0.0
    %220 = vmatpush1.msra.mxu0 %v211
    %221 = vmatprep.subr.mxu0 0.0
    %222 = vmatpush1.msra.mxu0 0.0
    %223 = vmatprep.subr.mxu0 0.0
    %224 = vmatpush1.msra.mxu0 0.0
    %225 = vmatprep.subr.mxu0 0.0
    %226 = vmatpush1.msra.mxu0 0.0
    %227 = vmatprep.subr.mxu0 0.0
    %228 = vmatpush1.msra.mxu0 0.0
    %229 = vmatprep.subr.mxu0 0.0
    %230 = vmatpush1.msra.mxu0 0.0
    %231 = vmatprep.subr.mxu0 0.0
    %232 = vmatpush1.msra.mxu0 0.0
    %233 = vmatprep.subr.mxu0 0.0
    %234 = vmatpush1.msra.mxu0 0.0
    %235 = vmatprep.subr.mxu0 0.0
    %236 = vmatpush1.msra.mxu0 0.0
    %237 = vmatprep.subr.mxu0 0.0
    %238 = vmatpush1.msra.mxu0 0.0
    %239 = vmatprep.subr.mxu0 0.0
    %240 = vmatpush1.msra.mxu0 0.0
    %241 = vmatprep.subr.mxu0 0.0
    %242 = vmatpush1.msra.mxu0 0.0
    %243 = vmatprep.subr.mxu0 0.0
    %244 = vmatpush1.msra.mxu0 0.0
    %245 = vmatprep.subr.mxu0 0.0
    %246 = vmatpush1.msra.mxu0 0.0
    %247 = vmatprep.subr.mxu0 0.0
    %248 = vmatpush1.msra.mxu0 0.0
    %249 = vmatprep.subr.mxu0 0.0
    %250 = vmatpush1.msra.mxu0 0.0
    %251 = vmatprep.subr.mxu0 0.0
    %252 = vmatpush1.msra.mxu0 0.0
    %253 = vmatprep.subr.mxu0 0.0
    %254 = vmatpush1.msra.mxu0 0.0
    %255 = vmatprep.subr.mxu0 0.0
    %256 = vmatpush1.msra.mxu0 0.0
    %257 = vmatprep.subr.mxu0 0.0
    %258 = vmatpush1.msra.mxu0 0.0
    %259 = vmatprep.subr.mxu0 0.0
    %260 = vmatpush1.msra.mxu0 0.0
    %261 = vmatprep.subr.mxu0 0.0
    %262 = vmatpush1.msra.mxu0 0.0
    %263 = vmatprep.subr.mxu0 0.0
    %264 = vmatpush1.msra.mxu0 0.0
    %265 = vmatprep.subr.mxu0 0.0
    %266 = vmatpush1.msra.mxu0 0.0
    %267 = vmatprep.subr.mxu0 0.0
    %268 = vmatpush1.msra.mxu0 0.0
    %269 = vmatprep.subr.mxu0 0.0
    %270 = vmatpush1.msra.mxu0 0.0
    %271 = vmatprep.subr.mxu0 0.0
    %272 = vmatpush1.msra.mxu0 0.0
    %273 = vmatprep.subr.mxu0 0.0
    %274 = vmatpush1.msra.mxu0 0.0
    %275 = vmatprep.subr.mxu0 0.0
    %276 = vmatpush1.msra.mxu0 0.0
    %277 = vmatprep.subr.mxu0 0.0
    %278 = vmatpush1.msra.mxu0 0.0
    %279 = vmatprep.subr.mxu0 0.0
    %280 = vmatpush1.msra.mxu0 0.0
    %281 = vmatprep.subr.mxu0 0.0
    %282 = vmatpush1.msra.mxu0 0.0
    %283 = vmatprep.mubr.f32.mxu0 0.0
    %284 = vmatmul.mubr.f32.gmra.mrb[0].mxu0 %v217
    %v285 = vpop.f32.mrb[0].mxu0
    %v286 = vadd.f32 %v214, %v285
    %v287 = vpop.f32.mrb[0].mxu0
    %288 = vdwg.mxu0
    %vm289 = vcmask 57344
    %290 = vst.msk [vmem:[#allocation3] sm:$0x1] %vm289, %v286
    // Predicated region
    $region30: #{tpu_custom_call.1} parent=1 // pred_check
      _
    $region31: #{tpu_custom_call.1} parent=1 // pred_check_branch
      %292 = sbr.rel (0) target = $region33
    $region32: #{tpu_custom_call.1} parent=1 // pred_region
      %s294 = ssub.s32 16, 16
      %295 = vsyncadd [#allocation4], %s294
      %s297 = sshll.u32 [#allocation3], 4
      %s298 = int_to_ptr.vmem [resolvable:$true] %s297
      %300 = dma.vmem_to_hbm [thread:$0]  %s298, 16, %s7, [#allocation4]
    $region33: #{tpu_custom_call.1} parent=1 // pred_fallthru
      _
    // Predicated region
    $region34: #{tpu_custom_call.1} parent=1 // pred_check
      _
    $region35: #{tpu_custom_call.1} parent=1 // pred_check_branch
      %302 = sbr.rel (0) target = $region37
    $region36: #{tpu_custom_call.1} parent=1 // pred_region
      %303 = dma.done [#allocation4], 16
    $region37: #{tpu_custom_call.1} parent=1 // pred_fallthru
      _
    %304 = vsyncpa [#allocation4], 1

</llo_original>
